<compile_context>
chip_gen: v7x
topology: tpu7x:2x2x1
jax: 0.10.0
libtpu: 0.0.40
codegen_flags: <defaults>
</compile_context>

<pallas_src>
import functools

import jax
import jax.numpy as jnp
from jax import lax
from jax.experimental import pallas as pl
from jax.experimental.pallas import tpu as pltpu

N = 5          # projection output features (matches the reference module)
_LANES = 128   # vreg lane width


def _round_up(a, m):
    return -(-a // m) * m


def _cdiv(a, b):
    return -(-a // b)


def _disc_kernel(x_ref, w_ref, b_ref, o_ref, acc_ref, *, k_valid, tk, grid_k):
    """One (TB, TK) tile of  sigmoid(x @ w_fused^T + b_fused).

    x_ref  : (TB, TK) f32 tile of the flattened input.  The last K block may
             overhang K (masked below); the last B block may overhang B
             (garbage rows are discarded by the partial output writeback).
    w_ref  : (1, TK)  f32 tile of the fused weight row.
    b_ref  : (1,)     f32 fused bias, in SMEM.
    o_ref  : (TB, 1)  f32 output tile, stored once on the last K step.
    acc_ref: (TB, 128) f32 lane-dense accumulator, resident across K.
    """
    k = pl.program_id(1)
    tb = acc_ref.shape[0]

    @pl.when(k == 0)
    def _():
        acc_ref[...] = jnp.zeros_like(acc_ref)

    mask_tail = (k_valid % tk) != 0            # static: does the last K block overhang?
    last_valid = k_valid - (grid_k - 1) * tk   # static, in (0, tk]
    if mask_tail:
        is_last = k == grid_k - 1
        # Valid lane count within this block: tk for non-last blocks.
        thr = jnp.where(is_last, last_valid, tk)
        col = lax.broadcasted_iota(jnp.int32, (tb, _LANES), 1)

    # Lane-dense VPU multiply-accumulate over 128-lane chunks (no MXU, no
    # large (TB, TK) temporary, no reshape/relayout).
    acc = acc_ref[...]
    for j in range(tk // _LANES):
        sl = pl.ds(j * _LANES, _LANES)
        contrib = x_ref[:, sl] * w_ref[:, sl]          # (TB,128) * (1,128)
        if mask_tail and (j + 1) * _LANES > last_valid:
            # This chunk overhangs K in the last K block: zero the OOB lanes
            # (their VMEM contents are unspecified and may be NaN/Inf).
            contrib = jnp.where(col < thr - j * _LANES, contrib, 0.0)
        acc = acc + contrib
    acc_ref[...] = acc

    @pl.when(k == grid_k - 1)
    def _():
        # Single cross-lane reduce (XLU) + bias + sigmoid on the last K step.
        logit = jnp.sum(acc, axis=-1, keepdims=True) + b_ref[0]
        # TODO(synk): reference applies sigmoid in float64; TPU has no
        # practical f64 path, so it is evaluated in float32 (~1e-7 difference).
        o_ref[...] = jax.nn.sigmoid(logit)


def _choose_tiles(B, K, tb_max, x_tile_bytes, tk_max):
    # Batch tile: multiple of 8 sublanes, or the full (tiny) batch.
    if B <= 8:
        tb = B                                     # full-dim block is always legal
    else:
        tb = min(_round_up(B, 8), max(8, _round_up(tb_max, 8)))
        if _cdiv(B, tb) < 2:
            # Guarantee >=2 blocks on the "parallel" batch axis so the v7x
            # megacore (2 TensorCores) has work on both cores.
            tb = max(8, _round_up(_cdiv(B, 2), 8))

    # K tile: multiple of 128 lanes, sized so one x tile fits the VMEM budget.
    k_full = _round_up(K, _LANES)
    budget = max(_LANES, (x_tile_bytes // (4 * tb)) // _LANES * _LANES)
    tk = min(k_full, budget, tk_max)
    grid_k = _cdiv(K, tk)
    return tb, tk, grid_k


def make_discriminator_forward(w0, b0, w1, b1, *, tb_max=128,
                               x_tile_bytes=8 << 20, tk_max=16384,
                               vmem_limit_bytes=48 << 20):
    """Builds a jitted Discriminator forward.

    w0: (N, K) projection weight, b0: (N,), w1: (1, N) final weight, b1: (1,).
    The two Linears are fused here, once per weight update (not per call).
    Returns a function x(B, C, H, W) -> probabilities (B, 1) float32.
    """
    w0 = jnp.asarray(w0, jnp.float32)
    b0 = jnp.asarray(b0, jnp.float32)
    w1 = jnp.asarray(w1, jnp.float32)
    b1 = jnp.asarray(b1, jnp.float32)
    K = w0.shape[1]

    # Algebraic fusion of Linear(K->N) and Linear(N->1).  The reshape to
    # (N,1,1) and view(B,N) in the reference are data no-ops.
    w_row = w1 @ w0                         # (1, K) fused weight row (lane-dense)
    b_fused = (w1 @ b0 + b1).reshape(1)     # (1,)  fused bias

    tk_cap = max(_LANES, (int(tk_max) // _LANES) * _LANES)

    def forward(x_nchw):
        B = x_nchw.shape[0]
        # Metadata-only reshape (row-major collapse) + dtype no-op for f32:
        # no extra HBM pass over x before the kernel.
        x2d = x_nchw.reshape(B, K).astype(jnp.float32)

        tb, tk, grid_k = _choose_tiles(B, K, tb_max, x_tile_bytes, tk_cap)
        grid_b = _cdiv(B, tb)

        kernel = functools.partial(_disc_kernel, k_valid=K, tk=tk, grid_k=grid_k)

        out = pl.pallas_call(
            kernel,
            out_shape=jax.ShapeDtypeStruct((B, 1), jnp.float32),
            grid_spec=pltpu.PrefetchScalarGridSpec(
                num_scalar_prefetch=0,
                grid=(grid_b, grid_k),
                in_specs=[
                    pl.BlockSpec((tb, tk), lambda i, k: (i, k)),
                    pl.BlockSpec((1, tk), lambda i, k: (0, k)),
                    pl.BlockSpec(memory_space=pltpu.MemorySpace.SMEM),
                ],
                out_specs=pl.BlockSpec((tb, 1), lambda i, k: (i, 0)),
                scratch_shapes=[pltpu.VMEM((tb, _LANES), jnp.float32)],
            ),
            compiler_params=pltpu.CompilerParams(
                dimension_semantics=("parallel", "arbitrary"),
                vmem_limit_bytes=vmem_limit_bytes,
            ),
            cost_estimate=pl.CostEstimate(
                flops=2 * B * K,
                transcendentals=B,
                bytes_accessed=4 * (B * K + K + B),
            ),
        )(x2d, w_row, b_fused)
        return out

    return jax.jit(forward)


def _reference_forward(x_nchw, w0, b0, w1, b1):
    """Plain-JAX (unfused) reference of the same forward pass."""
    B = x_nchw.shape[0]
    x_flat = x_nchw.reshape(B, -1).astype(jnp.float32)
    proj = x_flat @ w0.T + b0            # Projection -> (B, N)
    y = proj @ w1.T + b1                 # Linear(N, 1)
    return jax.nn.sigmoid(y)


if __name__ == "__main__":
    key = jax.random.PRNGKey(0)
    k_x, k_x2, k_w0, k_b0, k_w1, k_b1 = jax.random.split(key, 6)

    # Small shapes consistent with the module: NCHW input.
    B, C, H, W = 2, 4, 16, 16
    K = C * H * W

    x = jax.random.normal(k_x, (B, C, H, W), dtype=jnp.float32)
    x_big = jax.random.normal(k_x2, (10, C, H, W), dtype=jnp.float32)

    # Deterministic parameter init (torch.nn.Linear-style uniform bounds).
    bound0 = 1.0 / jnp.sqrt(K)
    w0 = jax.random.uniform(k_w0, (N, K), minval=-bound0, maxval=bound0,
                            dtype=jnp.float32)   # projection Linear weight
    b0 = jax.random.uniform(k_b0, (N,), minval=-bound0, maxval=bound0,
                            dtype=jnp.float32)
    bound1 = 1.0 / jnp.sqrt(N)
    w1 = jax.random.uniform(k_w1, (1, N), minval=-bound1, maxval=bound1,
                            dtype=jnp.float32)   # final Linear weight
    b1 = jax.random.uniform(k_b1, (1,), minval=-bound1, maxval=bound1,
                            dtype=jnp.float32)

    # Fusion + planning happen once here; the returned callables are jitted.
    fwd = make_discriminator_forward(w0, b0, w1, b1)
    # Small-tile config: exercises the multi-step K reduction (cdiv(1024,384)=3),
    # the masked K tail (1024 % 384 != 0) and partial batch blocks (10 % 8 != 0).
    fwd_tiled = make_discriminator_forward(w0, b0, w1, b1, tb_max=8, tk_max=384)

    ref_a = _reference_forward(x, w0, b0, w1, b1)
    ref_b = _reference_forward(x_big, w0, b0, w1, b1)

    out_a = jax.block_until_ready(fwd(x))
    out_b = jax.block_until_ready(fwd(x_big))
    out_c = jax.block_until_ready(fwd_tiled(x_big))

    assert out_a.shape == (B, 1), out_a.shape
    assert out_b.shape == (10, 1), out_b.shape
    assert out_c.shape == (10, 1), out_c.shape
    assert jnp.allclose(out_a, ref_a, atol=1e-5, rtol=1e-5), (out_a, ref_a)
    assert jnp.allclose(out_b, ref_b, atol=1e-5, rtol=1e-5), (out_b, ref_b)
    assert jnp.allclose(out_c, ref_b, atol=1e-5, rtol=1e-5), (out_c, ref_b)

    print("KERNEL_OK")
</pallas_src>

<mosaic_0001>
module attributes {stable_mosaic.version = 11 : i64} {
  func.func @_disc_kernel(%arg0: i32, %arg1: i32, %arg2: memref<2x1024xf32, #tpu.memory_space<vmem>>, %arg3: memref<1x1024xf32, #tpu.memory_space<vmem>>, %arg4: memref<1xf32, #tpu.memory_space<smem>>, %arg5: memref<2x1xf32, #tpu.memory_space<vmem>>, %arg6: memref<2x128xf32, #tpu.memory_space<vmem>>) attributes {dimension_semantics = [#tpu.dimension_semantics<parallel>, #tpu.dimension_semantics<arbitrary>], iteration_bounds = array<i64: 1, 1>, scalar_prefetch = 0 : i64, scratch_operands = 1 : i64, tpu.core_type = #tpu.core_type<tc>, window_params = [{transform_indices = @transform_0, window_bounds = array<i64: 2, 1024>}, {transform_indices = @transform_1, window_bounds = array<i64: 1, 1024>}, {transform_indices = @transform_2, window_bounds = array<i64: 1>}, {transform_indices = @transform_3, window_bounds = array<i64: 2, 1>}]} {
    %c0_i32 = arith.constant 0 : i32
    %0 = arith.cmpi eq, %arg1, %c0_i32 : i32
    %1 = arith.extui %0 : i1 to i32
    %c0_i32_0 = arith.constant 0 : i32
    %2 = arith.cmpi ne, %1, %c0_i32_0 : i32
    scf.if %2 {
      %cst = arith.constant 0.000000e+00 : f32
      %48 = vector.broadcast %cst : f32 to vector<2x128xf32>
      %c0_31 = arith.constant 0 : index
      %c0_32 = arith.constant 0 : index
      %49 = vector.load %arg6[%c0_31, %c0_32] : memref<2x128xf32, #tpu.memory_space<vmem>>, vector<2x128xf32>
      tpu.vector_store %arg6[%c0_31, %c0_32], %48 {strides = array<i32>} : memref<2x128xf32, #tpu.memory_space<vmem>>, vector<2x128xf32>,
    } else {
    }
    %c0 = arith.constant 0 : index
    %c0_1 = arith.constant 0 : index
    %3 = vector.load %arg6[%c0, %c0_1] : memref<2x128xf32, #tpu.memory_space<vmem>>, vector<2x128xf32>
    %c0_2 = arith.constant 0 : index
    %c0_3 = arith.constant 0 : index
    %4 = vector.load %arg2[%c0_2, %c0_3] : memref<2x1024xf32, #tpu.memory_space<vmem>>, vector<2x128xf32>
    %c0_4 = arith.constant 0 : index
    %c0_5 = arith.constant 0 : index
    %5 = vector.load %arg3[%c0_4, %c0_5] : memref<1x1024xf32, #tpu.memory_space<vmem>>, vector<1x128xf32>
    %6 = vector.broadcast %5 : vector<1x128xf32> to vector<2x128xf32>
    %7 = arith.mulf %4, %6 : vector<2x128xf32>
    %8 = arith.addf %3, %7 : vector<2x128xf32>
    %c0_6 = arith.constant 0 : index
    %c128 = arith.constant 128 : index
    %9 = vector.load %arg2[%c0_6, %c128] : memref<2x1024xf32, #tpu.memory_space<vmem>>, vector<2x128xf32>
    %c0_7 = arith.constant 0 : index
    %c128_8 = arith.constant 128 : index
    %10 = vector.load %arg3[%c0_7, %c128_8] : memref<1x1024xf32, #tpu.memory_space<vmem>>, vector<1x128xf32>
    %11 = vector.broadcast %10 : vector<1x128xf32> to vector<2x128xf32>
    %12 = arith.mulf %9, %11 : vector<2x128xf32>
    %13 = arith.addf %8, %12 : vector<2x128xf32>
    %c0_9 = arith.constant 0 : index
    %c256 = arith.constant 256 : index
    %14 = vector.load %arg2[%c0_9, %c256] : memref<2x1024xf32, #tpu.memory_space<vmem>>, vector<2x128xf32>
    %c0_10 = arith.constant 0 : index
    %c256_11 = arith.constant 256 : index
    %15 = vector.load %arg3[%c0_10, %c256_11] : memref<1x1024xf32, #tpu.memory_space<vmem>>, vector<1x128xf32>
    %16 = vector.broadcast %15 : vector<1x128xf32> to vector<2x128xf32>
    %17 = arith.mulf %14, %16 : vector<2x128xf32>
    %18 = arith.addf %13, %17 : vector<2x128xf32>
    %c0_12 = arith.constant 0 : index
    %c384 = arith.constant 384 : index
    %19 = vector.load %arg2[%c0_12, %c384] : memref<2x1024xf32, #tpu.memory_space<vmem>>, vector<2x128xf32>
    %c0_13 = arith.constant 0 : index
    %c384_14 = arith.constant 384 : index
    %20 = vector.load %arg3[%c0_13, %c384_14] : memref<1x1024xf32, #tpu.memory_space<vmem>>, vector<1x128xf32>
    %21 = vector.broadcast %20 : vector<1x128xf32> to vector<2x128xf32>
    %22 = arith.mulf %19, %21 : vector<2x128xf32>
    %23 = arith.addf %18, %22 : vector<2x128xf32>
    %c0_15 = arith.constant 0 : index
    %c512 = arith.constant 512 : index
    %24 = vector.load %arg2[%c0_15, %c512] : memref<2x1024xf32, #tpu.memory_space<vmem>>, vector<2x128xf32>
    %c0_16 = arith.constant 0 : index
    %c512_17 = arith.constant 512 : index
    %25 = vector.load %arg3[%c0_16, %c512_17] : memref<1x1024xf32, #tpu.memory_space<vmem>>, vector<1x128xf32>
    %26 = vector.broadcast %25 : vector<1x128xf32> to vector<2x128xf32>
    %27 = arith.mulf %24, %26 : vector<2x128xf32>
    %28 = arith.addf %23, %27 : vector<2x128xf32>
    %c0_18 = arith.constant 0 : index
    %c640 = arith.constant 640 : index
    %29 = vector.load %arg2[%c0_18, %c640] : memref<2x1024xf32, #tpu.memory_space<vmem>>, vector<2x128xf32>
    %c0_19 = arith.constant 0 : index
    %c640_20 = arith.constant 640 : index
    %30 = vector.load %arg3[%c0_19, %c640_20] : memref<1x1024xf32, #tpu.memory_space<vmem>>, vector<1x128xf32>
    %31 = vector.broadcast %30 : vector<1x128xf32> to vector<2x128xf32>
    %32 = arith.mulf %29, %31 : vector<2x128xf32>
    %33 = arith.addf %28, %32 : vector<2x128xf32>
    %c0_21 = arith.constant 0 : index
    %c768 = arith.constant 768 : index
    %34 = vector.load %arg2[%c0_21, %c768] : memref<2x1024xf32, #tpu.memory_space<vmem>>, vector<2x128xf32>
    %c0_22 = arith.constant 0 : index
    %c768_23 = arith.constant 768 : index
    %35 = vector.load %arg3[%c0_22, %c768_23] : memref<1x1024xf32, #tpu.memory_space<vmem>>, vector<1x128xf32>
    %36 = vector.broadcast %35 : vector<1x128xf32> to vector<2x128xf32>
    %37 = arith.mulf %34, %36 : vector<2x128xf32>
    %38 = arith.addf %33, %37 : vector<2x128xf32>
    %c0_24 = arith.constant 0 : index
    %c896 = arith.constant 896 : index
    %39 = vector.load %arg2[%c0_24, %c896] : memref<2x1024xf32, #tpu.memory_space<vmem>>, vector<2x128xf32>
    %c0_25 = arith.constant 0 : index
    %c896_26 = arith.constant 896 : index
    %40 = vector.load %arg3[%c0_25, %c896_26] : memref<1x1024xf32, #tpu.memory_space<vmem>>, vector<1x128xf32>
    %41 = vector.broadcast %40 : vector<1x128xf32> to vector<2x128xf32>
    %42 = arith.mulf %39, %41 : vector<2x128xf32>
    %43 = arith.addf %38, %42 : vector<2x128xf32>
    %c0_27 = arith.constant 0 : index
    %c0_28 = arith.constant 0 : index
    %44 = vector.load %arg6[%c0_27, %c0_28] : memref<2x128xf32, #tpu.memory_space<vmem>>, vector<2x128xf32>
    tpu.vector_store %arg6[%c0_27, %c0_28], %43 {strides = array<i32>} : memref<2x128xf32, #tpu.memory_space<vmem>>, vector<2x128xf32>,
    %c0_i32_29 = arith.constant 0 : i32
    %45 = arith.cmpi eq, %arg1, %c0_i32_29 : i32
    %46 = arith.extui %45 : i1 to i32
    %c0_i32_30 = arith.constant 0 : i32
    %47 = arith.cmpi ne, %46, %c0_i32_30 : i32
    scf.if %47 {
      %cst = arith.constant dense<0.000000e+00> : vector<2xf32>
      %48 = vector.multi_reduction <add>, %43, %cst [1] : vector<2x128xf32> to vector<2xf32>
      %49 = vector.shape_cast %48 : vector<2xf32> to vector<2x1xf32>
      %c0_31 = arith.constant 0 : index
      %50 = memref.load %arg4[%c0_31] : memref<1xf32, #tpu.memory_space<smem>>
      %51 = vector.broadcast %50 : f32 to vector<2x1xf32>
      %52 = arith.addf %49, %51 : vector<2x1xf32>
      %53 = arith.negf %52 : vector<2x1xf32>
      %54 = math.exp %53 : vector<2x1xf32>
      %cst_32 = arith.constant 1.000000e+00 : f32
      %55 = vector.broadcast %cst_32 : f32 to vector<2x1xf32>
      %56 = arith.addf %55, %54 : vector<2x1xf32>
      %57 = arith.divf %55, %56 : vector<2x1xf32>
      %c0_33 = arith.constant 0 : index
      %c0_34 = arith.constant 0 : index
      %58 = vector.load %arg5[%c0_33, %c0_34] : memref<2x1xf32, #tpu.memory_space<vmem>>, vector<2x1xf32>
      tpu.vector_store %arg5[%c0_33, %c0_34], %57 {strides = array<i32>} : memref<2x1xf32, #tpu.memory_space<vmem>>, vector<2x1xf32>,
    } else {
    }
    return
  }
  func.func @transform_0(%arg0: i32, %arg1: i32) -> (i32, i32) {
    %c0_i32 = arith.constant 0 : i32
    return %arg0, %arg1 : i32, i32
  }
  func.func @transform_1(%arg0: i32, %arg1: i32) -> (i32, i32) {
    %c0_i32 = arith.constant 0 : i32
    %c0_i32_0 = arith.constant 0 : i32
    return %c0_i32, %arg1 : i32, i32
  }
  func.func @transform_2(%arg0: i32, %arg1: i32) -> i32 {
    %c0_i32 = arith.constant 0 : i32
    %c0_i32_0 = arith.constant 0 : i32
    return %c0_i32 : i32
  }
  func.func @transform_3(%arg0: i32, %arg1: i32) -> (i32, i32) {
    %c0_i32 = arith.constant 0 : i32
    %c0_i32_0 = arith.constant 0 : i32
    return %arg0, %c0_i32 : i32, i32
  }
}

</mosaic_0001>

<llo_original>
// kernel: forward.1
$region0: #{forward.1}
  #allocation0 [shape = 'u32[]', space=smem, size = 0x4, offset = 0x4, fixed_abs, tag = 'smem constant byte address 0x4 - core index']
  #allocation1 [shape = 'u32[144,128]{1,0:T(1,128)}', space=vmem, size = 0x12000, scoped, tag = 'internal scratch']
  #allocation2 [shape = 'f32[2,128]{1,0:T(2,128)}', space=vmem, size = 0x400, scoped, tag = 'scratch operand']
  #allocation3 [shape = 'f32[1]{0:T(128)S(6)}', space=smem, size = 0x200, scoped, tag = 'scoped memory for forward.1']
  %s0 = inlined_call_operand.vmem [shape: f32[2,1024], index: 0, kind: input, shape index: {}]
  %s1 = inlined_call_operand.vmem [shape: f32[1,1024], index: 1, kind: input, shape index: {}]
  %s2 = inlined_call_operand.<no memory space> [shape: f32[1], index: 2, kind: input, shape index: {}]
  %s3 = inlined_call_operand.vmem [shape: f32[2,1], index: 3, kind: output, shape index: {}]
  %s4 = sld [smem:[#allocation0]]
  $region30: #{forward.1} parent=0
    _
  %s6 = ssub.s32 1, %s4
  %s7 = scalar_select 0, %s6, %s4
  %8 = sst [smem:[#allocation3]] %s2
  // Predicated region
  $region2: #{forward.1} parent=0 // pred_check
    _
  $region3: #{forward.1} parent=0 // pred_check_branch
    %10 = sbr.rel (0) target = $region5
  $region4: #{forward.1} parent=0 // pred_region
    _
  $region5: #{forward.1} parent=0 // pred_fallthru
    _
  // Predicated region
  $region6: #{forward.1} parent=0 // pred_check
    _
  $region7: #{forward.1} parent=0 // pred_check_branch
    %12 = sbr.rel (0) target = $region9
  $region8: #{forward.1} parent=0 // pred_region
    _
  $region9: #{forward.1} parent=0 // pred_fallthru
    _
  // Predicated region
  $region10: #{forward.1} parent=0 // pred_check
    _
  $region11: #{forward.1} parent=0 // pred_check_branch
    %14 = sbr.rel (0) target = $region13
  $region12: #{forward.1} parent=0 // pred_region
    _
  $region13: #{forward.1} parent=0 // pred_fallthru
    _
  %p15 = scmp.eq.s32.totalorder 0, 0
  // Predicated region
  $region14: #{forward.1} parent=0 // pred_check
    %p16 = pneg %p15
  $region15: #{forward.1} parent=0 // pred_check_branch
    %18 = sbr.rel (%p16) target = $region17
  $region16: #{forward.1} parent=0 // pred_region
    %19 = vst [vmem:[#allocation2] sm:$0x3] 0.0
  $region17: #{forward.1} parent=0 // pred_fallthru
    _
  %v20 = vld [vmem:[#allocation2] sm:$0x3]
  %v21 = vld [vmem:[%s0] sm:$0x3]
  %v22 = vld [vmem:[%s1] sm:$0x1]
  %v24 = vlaneseq
  %v25 = vshrl.u32 %v24, 7
  %v26 = vsub.s32 0, %v25
  %v27 = vrot.slane %v22, %v26
  %v29 = vmul.f32 %v21, %v27
  %v30 = vadd.f32 %v20, %v29
  %v31 = vld [vmem:[%s0 + $0x2] sm:$0x3]
  %v32 = vld [vmem:[%s1 + $0x1] sm:$0x1]
  %v34 = vlaneseq
  %v35 = vshrl.u32 %v34, 7
  %v36 = vsub.s32 0, %v35
  %v37 = vrot.slane %v32, %v36
  %v39 = vmul.f32 %v31, %v37
  %v40 = vadd.f32 %v30, %v39
  %v41 = vld [vmem:[%s0 + $0x4] sm:$0x3]
  %v42 = vld [vmem:[%s1 + $0x2] sm:$0x1]
  %v44 = vlaneseq
  %v45 = vshrl.u32 %v44, 7
  %v46 = vsub.s32 0, %v45
  %v47 = vrot.slane %v42, %v46
  %v49 = vmul.f32 %v41, %v47
  %v50 = vadd.f32 %v40, %v49
  %v51 = vld [vmem:[%s0 + $0x6] sm:$0x3]
  %v52 = vld [vmem:[%s1 + $0x3] sm:$0x1]
  %v54 = vlaneseq
  %v55 = vshrl.u32 %v54, 7
  %v56 = vsub.s32 0, %v55
  %v57 = vrot.slane %v52, %v56
  %v59 = vmul.f32 %v51, %v57
  %v60 = vadd.f32 %v50, %v59
  %v61 = vld [vmem:[%s0 + $0x8] sm:$0x3]
  %v62 = vld [vmem:[%s1 + $0x4] sm:$0x1]
  %v64 = vlaneseq
  %v65 = vshrl.u32 %v64, 7
  %v66 = vsub.s32 0, %v65
  %v67 = vrot.slane %v62, %v66
  %v69 = vmul.f32 %v61, %v67
  %v70 = vadd.f32 %v60, %v69
  %v71 = vld [vmem:[%s0 + $0xa] sm:$0x3]
  %v72 = vld [vmem:[%s1 + $0x5] sm:$0x1]
  %v74 = vlaneseq
  %v75 = vshrl.u32 %v74, 7
  %v76 = vsub.s32 0, %v75
  %v77 = vrot.slane %v72, %v76
  %v79 = vmul.f32 %v71, %v77
  %v80 = vadd.f32 %v70, %v79
  %v81 = vld [vmem:[%s0 + $0xc] sm:$0x3]
  %v82 = vld [vmem:[%s1 + $0x6] sm:$0x1]
  %v84 = vlaneseq
  %v85 = vshrl.u32 %v84, 7
  %v86 = vsub.s32 0, %v85
  %v87 = vrot.slane %v82, %v86
  %v89 = vmul.f32 %v81, %v87
  %v90 = vadd.f32 %v80, %v89
  %v91 = vld [vmem:[%s0 + $0xe] sm:$0x3]
  %v92 = vld [vmem:[%s1 + $0x7] sm:$0x1]
  %v94 = vlaneseq
  %v95 = vshrl.u32 %v94, 7
  %v96 = vsub.s32 0, %v95
  %v97 = vrot.slane %v92, %v96
  %v99 = vmul.f32 %v91, %v97
  %v100 = vadd.f32 %v90, %v99
  %101 = vst [vmem:[#allocation2] sm:$0x3] %v100
  // Predicated region
  $region18: #{forward.1} parent=0 // pred_check
    %p102 = pneg %p15
  $region19: #{forward.1} parent=0 // pred_check_branch
    %104 = sbr.rel (%p102) target = $region21
  $region20: #{forward.1} parent=0 // pred_region
    %vm105 = vcmask 1041408
    %v106 = vsel %vm105, %v100, 0.0
    %107 = vadd.xlane.f32.xlu0 %v106
    %v108 = vpop.xlane.xlu0 %107
    %s109 = sld [smem:[#allocation3]]
    %v110 = vstv %s109
    %v111 = vadd.f32 %v108, %v110
    %v112 = vxor.u32 %v111, 2147483648
    %v113 = vmul.f32 %v112, 1.442695
    %v114 = vpow.pop %v113
    %v115 = vadd.f32 %v114, 1.0
    %v116 = vrcp.pop %v115
    %v117 = vmul.f32 1.0, %v116
    %vm118 = vcmask 1024
    %119 = vst.msk [vmem:[%s3] sm:$0x3] %vm118, %v117
  $region21: #{forward.1} parent=0 // pred_fallthru
    _
  // Predicated region
  $region22: #{forward.1} parent=0 // pred_check
    _
  $region23: #{forward.1} parent=0 // pred_check_branch
    %121 = sbr.rel (0) target = $region25
  $region24: #{forward.1} parent=0 // pred_region
    _
  $region25: #{forward.1} parent=0 // pred_fallthru
    _
  // Predicated region
  $region26: #{forward.1} parent=0 // pred_check
    _
  $region27: #{forward.1} parent=0 // pred_check_branch
    %123 = sbr.rel (0) target = $region29
  $region28: #{forward.1} parent=0 // pred_region
    _
  $region29: #{forward.1} parent=0 // pred_fallthru
    _

</llo_original>
